<compile_context>
chip_gen: v5e
topology: v5e:2x2
jax: 0.10.0
libtpu: 0.0.40
codegen_flags: <defaults>
</compile_context>

<pallas_src>
import functools

import jax
import jax.numpy as jnp
from jax.experimental import pallas as pl
from jax.experimental.pallas import tpu as pltpu

BINARY_MODE = "binary"
MULTICLASS_MODE = "multiclass"
MULTILABEL_MODE = "multilabel"

_LANE = 128
_MAX_TILE = 8 * 1024                  # lanes per spatial tile (upper cap)
_VMEM_BUDGET_BYTES = 20 * 1024 * 1024  # fits v5e/v6e/v7x with double buffering
_VMEM_LIMIT_BYTES = 32 * 1024 * 1024
_NUM_PARALLEL = 2                     # shard spatial loop over (up to) 2 TCs (v7x)


def _round_up(x, m):
    return ((x + m - 1) // m) * m


def _choose_tile(n, bytes_per_lane):
    """Largest multiple of 128 (<= _MAX_TILE) whose VMEM footprint fits budget."""
    n128 = _round_up(max(n, 1), _LANE)
    tn = min(_MAX_TILE, n128)
    tn = max(_LANE, (tn // _LANE) * _LANE)
    while tn > _LANE and tn * bytes_per_lane > _VMEM_BUDGET_BYTES:
        tn -= _LANE
    return tn


def _grid_layout(n, bytes_per_lane):
    """Returns (tile, parallel_cores, k_per_core, padded_n)."""
    tn = _choose_tile(n, bytes_per_lane)
    k_tot = _round_up(n, tn) // tn
    if k_tot >= _NUM_PARALLEL:
        k_tot = _round_up(k_tot, _NUM_PARALLEL)
        p = _NUM_PARALLEL
    else:
        p = 1
    return tn, p, k_tot // p, k_tot * tn


# ---------------------------------------------------------------------------
# Pallas kernels: accumulate per-class [intersection, sum(p), sum(t)]
# ---------------------------------------------------------------------------
def _multiclass_dice_sums_kernel(logits_ref, labels_ref, out_ref,
                                 iota_ref, acc_i_ref, acc_p_ref, acc_t_ref,
                                 *, from_logits, n_valid):
    k = pl.program_id(1)
    C, TN = acc_i_ref.shape

    @pl.when(k == 0)
    def _init():
        iota_ref[...] = jax.lax.broadcasted_iota(jnp.int32, (C, TN), 0)
        acc_i_ref[...] = jnp.zeros_like(acc_i_ref)
        acc_p_ref[...] = jnp.zeros_like(acc_p_ref)
        acc_t_ref[...] = jnp.zeros_like(acc_t_ref)

    x = logits_ref[...].astype(jnp.float32)      # (B, C, TN)
    labels = labels_ref[...]                     # (B, TN) int32

    if from_logits:
        m = jnp.max(x, axis=1, keepdims=True)
        e = jnp.exp(x - m)
        p = e * pl.reciprocal(jnp.sum(e, axis=1, keepdims=True), approx=True)
    else:
        p = x

    # one-hot targets from the hoisted per-class iota (padded lanes hold label
    # C which never matches, so t == 0 there).
    t = (iota_ref[...][None, :, :] == labels[:, None, :]).astype(jnp.float32)

    acc_i_ref[...] += jnp.sum(p * t, axis=0)     # (C, TN)
    acc_t_ref[...] += jnp.sum(t, axis=0)

    p_sum = jnp.sum(p, axis=0)                   # (C, TN)
    if n_valid is not None:
        # softmax over padded logits still carries probability mass -> mask it.
        base = (pl.program_id(0) * pl.num_programs(1) + k) * TN
        lane = jax.lax.broadcasted_iota(jnp.int32, (1, TN), 1)
        p_sum = p_sum * ((lane + base) < n_valid).astype(jnp.float32)
    acc_p_ref[...] += p_sum

    @pl.when(k == pl.num_programs(1) - 1)
    def _flush():
        out_ref[:, 0:1, :] = jnp.sum(acc_i_ref[...], axis=-1).reshape(1, 1, C)
        out_ref[:, 1:2, :] = jnp.sum(acc_p_ref[...], axis=-1).reshape(1, 1, C)
        out_ref[:, 2:3, :] = jnp.sum(acc_t_ref[...], axis=-1).reshape(1, 1, C)


def _sigmoid_dice_sums_kernel(pred_ref, true_ref, out_ref,
                              acc_i_ref, acc_p_ref, acc_t_ref,
                              *, from_logits, n_valid):
    k = pl.program_id(1)
    BC, TN = acc_i_ref.shape

    @pl.when(k == 0)
    def _init():
        acc_i_ref[...] = jnp.zeros_like(acc_i_ref)
        acc_p_ref[...] = jnp.zeros_like(acc_p_ref)
        acc_t_ref[...] = jnp.zeros_like(acc_t_ref)

    p = pred_ref[...].astype(jnp.float32)        # (BC, TN)
    t = true_ref[...].astype(jnp.float32)        # (BC, TN); padded lanes are 0
    if from_logits:
        p = jax.nn.sigmoid(p)

    acc_i_ref[...] += p * t
    acc_t_ref[...] += t
    if n_valid is not None:
        base = (pl.program_id(0) * pl.num_programs(1) + k) * TN
        lane = jax.lax.broadcasted_iota(jnp.int32, (1, TN), 1)
        p = p * ((lane + base) < n_valid).astype(jnp.float32)
    acc_p_ref[...] += p

    @pl.when(k == pl.num_programs(1) - 1)
    def _flush():
        out_ref[:, 0:1, :] = jnp.sum(acc_i_ref[...], axis=-1).reshape(1, 1, BC)
        out_ref[:, 1:2, :] = jnp.sum(acc_p_ref[...], axis=-1).reshape(1, 1, BC)
        out_ref[:, 2:3, :] = jnp.sum(acc_t_ref[...], axis=-1).reshape(1, 1, BC)


# ---------------------------------------------------------------------------
# pallas_call wrappers
# ---------------------------------------------------------------------------
def _multiclass_sums(logits_bcn, labels_bn, from_logits):
    B, C, N = logits_bcn.shape
    labels_bn = labels_bn.astype(jnp.int32)
    esize = jnp.dtype(logits_bcn.dtype).itemsize
    # per-lane VMEM: 2x double-buffered inputs + f32 accumulators/iota + temps
    bytes_per_lane = 2 * (B * C * esize + B * 4) + 4 * C * 4 + 5 * B * C * 4
    tn, P, k_per, n_pad = _grid_layout(N, bytes_per_lane)

    if n_pad != N:
        logits_bcn = jnp.pad(logits_bcn, ((0, 0), (0, 0), (0, n_pad - N)))
        labels_bn = jnp.pad(labels_bn, ((0, 0), (0, n_pad - N)), constant_values=C)
        n_valid = N
    else:
        n_valid = None

    kernel = functools.partial(_multiclass_dice_sums_kernel,
                               from_logits=from_logits, n_valid=n_valid)
    out = pl.pallas_call(
        kernel,
        out_shape=jax.ShapeDtypeStruct((P, 3, C), jnp.float32),
        grid_spec=pltpu.PrefetchScalarGridSpec(
            num_scalar_prefetch=0,
            grid=(P, k_per),
            in_specs=[
                pl.BlockSpec((B, C, tn), lambda p, k: (0, 0, p * k_per + k)),
                pl.BlockSpec((B, tn), lambda p, k: (0, p * k_per + k)),
            ],
            out_specs=pl.BlockSpec((1, 3, C), lambda p, k: (p, 0, 0)),
            scratch_shapes=[
                pltpu.VMEM((C, tn), jnp.int32),    # hoisted class iota
                pltpu.VMEM((C, tn), jnp.float32),  # intersection partials
                pltpu.VMEM((C, tn), jnp.float32),  # sum(p) partials
                pltpu.VMEM((C, tn), jnp.float32),  # sum(t) partials
            ],
        ),
        compiler_params=pltpu.CompilerParams(
            dimension_semantics=("parallel", "arbitrary"),
            vmem_limit_bytes=_VMEM_LIMIT_BYTES,
        ),
        cost_estimate=pl.CostEstimate(
            flops=int(8 * B * C * n_pad),
            transcendentals=int(B * C * n_pad) if from_logits else 0,
            bytes_accessed=int(B * C * n_pad * esize + B * n_pad * 4 + P * 3 * C * 4),
        ),
    )(logits_bcn, labels_bn)
    return out.sum(axis=0)  # (3, C)


def _sigmoid_sums(pred_bcn, true_bcn, from_logits):
    B, C, N = pred_bcn.shape
    BC = B * C
    pred = pred_bcn.reshape(BC, N)     # fold B into the sublane axis
    true = true_bcn.reshape(BC, N)
    ep = jnp.dtype(pred.dtype).itemsize
    et = jnp.dtype(true.dtype).itemsize
    bytes_per_lane = 2 * BC * (ep + et) + 3 * BC * 4 + 3 * BC * 4
    tn, P, k_per, n_pad = _grid_layout(N, bytes_per_lane)

    if n_pad != N:
        pred = jnp.pad(pred, ((0, 0), (0, n_pad - N)))
        true = jnp.pad(true, ((0, 0), (0, n_pad - N)))
        n_valid = N
    else:
        n_valid = None

    kernel = functools.partial(_sigmoid_dice_sums_kernel,
                               from_logits=from_logits, n_valid=n_valid)
    out = pl.pallas_call(
        kernel,
        out_shape=jax.ShapeDtypeStruct((P, 3, BC), jnp.float32),
        grid_spec=pltpu.PrefetchScalarGridSpec(
            num_scalar_prefetch=0,
            grid=(P, k_per),
            in_specs=[
                pl.BlockSpec((BC, tn), lambda p, k: (0, p * k_per + k)),
                pl.BlockSpec((BC, tn), lambda p, k: (0, p * k_per + k)),
            ],
            out_specs=pl.BlockSpec((1, 3, BC), lambda p, k: (p, 0, 0)),
            scratch_shapes=[
                pltpu.VMEM((BC, tn), jnp.float32),
                pltpu.VMEM((BC, tn), jnp.float32),
                pltpu.VMEM((BC, tn), jnp.float32),
            ],
        ),
        compiler_params=pltpu.CompilerParams(
            dimension_semantics=("parallel", "arbitrary"),
            vmem_limit_bytes=_VMEM_LIMIT_BYTES,
        ),
        cost_estimate=pl.CostEstimate(
            flops=int(5 * BC * n_pad),
            transcendentals=int(BC * n_pad) if from_logits else 0,
            bytes_accessed=int(BC * n_pad * (ep + et) + P * 3 * BC * 4),
        ),
    )(pred, true)
    sums = out.sum(axis=0)                    # (3, BC)
    return sums.reshape(3, B, C).sum(axis=1)  # (3, C)


# ---------------------------------------------------------------------------
# DiceLoss wrapper (tiny per-class epilogue in plain JAX)
# ---------------------------------------------------------------------------
class DiceLoss:
    def __init__(self, mode, include_classes=None, log_loss=False,
                 from_logits=True, smooth=0.0, eps=1e-7):
        if mode not in (BINARY_MODE, MULTICLASS_MODE, MULTILABEL_MODE):
            raise ValueError("Mode must be one of [binary, multiclass, multilabel]")
        if include_classes is not None:
            assert mode != BINARY_MODE, "Masking classes is not supported with mode=binary"
        self.mode = mode
        self.include_classes = include_classes
        self.log_loss = log_loss
        self.from_logits = from_logits
        self.smooth = float(smooth)
        self.eps = float(eps)

    def __call__(self, y_pred, y_true):
        assert y_true.shape[0] == y_pred.shape[0]
        bs = y_pred.shape[0]
        num_classes = y_pred.shape[1]

        if self.mode == MULTICLASS_MODE:
            logits = y_pred.reshape(bs, num_classes, -1)
            labels = y_true.reshape(bs, -1).astype(jnp.int32)
            sums = _multiclass_sums(logits, labels, self.from_logits)
        elif self.mode == BINARY_MODE:
            pred = y_pred.reshape(bs, 1, -1)
            true = y_true.reshape(bs, 1, -1).astype(y_pred.dtype)
            sums = _sigmoid_sums(pred, true, self.from_logits)
        else:  # MULTILABEL_MODE
            pred = y_pred.reshape(bs, num_classes, -1)
            true = y_true.reshape(bs, num_classes, -1).astype(y_pred.dtype)
            sums = _sigmoid_sums(pred, true, self.from_logits)

        intersection, psum, tsum = sums[0], sums[1], sums[2]
        cardinality = psum + tsum
        score = (2.0 * intersection + self.smooth) / (
            jnp.maximum(cardinality, self.eps) + self.smooth)

        if self.log_loss:
            loss = -jnp.log(jnp.maximum(score, self.eps))
        else:
            loss = 1.0 - score

        loss = loss * (tsum > 0).astype(loss.dtype)
        if self.include_classes is not None:
            loss = loss[jnp.asarray(self.include_classes, dtype=jnp.int32)]
        return loss.mean()


# ---------------------------------------------------------------------------
# Pure-JAX reference mirroring the PyTorch forward (for verification)
# ---------------------------------------------------------------------------
def _reference_dice_loss(y_pred, y_true, mode, include_classes=None,
                         log_loss=False, from_logits=True, smooth=0.0, eps=1e-7):
    y_pred = jnp.asarray(y_pred, jnp.float32)
    bs, c = y_pred.shape[0], y_pred.shape[1]
    if from_logits:
        y_pred = (jax.nn.softmax(y_pred, axis=1) if mode == MULTICLASS_MODE
                  else jax.nn.sigmoid(y_pred))
    if mode == BINARY_MODE:
        yt = y_true.reshape(bs, 1, -1).astype(jnp.float32)
        yp = y_pred.reshape(bs, 1, -1)
    elif mode == MULTICLASS_MODE:
        yt = jax.nn.one_hot(y_true.reshape(bs, -1).astype(jnp.int32), c,
                            dtype=jnp.float32).transpose(0, 2, 1)
        yp = y_pred.reshape(bs, c, -1)
    else:
        yt = y_true.reshape(bs, c, -1).astype(jnp.float32)
        yp = y_pred.reshape(bs, c, -1)
    inter = jnp.sum(yp * yt, axis=(0, 2))
    card = jnp.sum(yp + yt, axis=(0, 2))
    score = (2.0 * inter + smooth) / (jnp.maximum(card, eps) + smooth)
    loss = -jnp.log(jnp.maximum(score, eps)) if log_loss else 1.0 - score
    loss = loss * (jnp.sum(yt, axis=(0, 2)) > 0).astype(loss.dtype)
    if include_classes is not None:
        loss = loss[jnp.asarray(include_classes, dtype=jnp.int32)]
    return loss.mean()


if __name__ == "__main__":
    key = jax.random.PRNGKey(0)
    ks = jax.random.split(key, 8)

    B, C, H, W = 2, 4, 16, 16
    TOL = dict(atol=2e-3, rtol=2e-3)   # approx-reciprocal softmax denom

    # --- multiclass: logits (B,C,H,W), integer labels (B,H,W) ---
    logits = jax.random.normal(ks[0], (B, C, H, W), dtype=jnp.float32)
    labels = jax.random.randint(ks[1], (B, H, W), 0, C, dtype=jnp.int32)
    got = jax.block_until_ready(DiceLoss(MULTICLASS_MODE)(logits, labels))
    ref = _reference_dice_loss(logits, labels, MULTICLASS_MODE)
    assert jnp.allclose(got, ref, **TOL), (got, ref)

    # --- multiclass, non-128-multiple spatial size + include_classes/log_loss
    #     (exercises padding + in-kernel lane mask) ---
    H2 = W2 = 15
    logits2 = jax.random.normal(ks[2], (B, C, H2, W2), dtype=jnp.float32)
    labels2 = jax.random.randint(ks[3], (B, H2, W2), 0, C, dtype=jnp.int32)
    got2 = jax.block_until_ready(
        DiceLoss(MULTICLASS_MODE, include_classes=[1, 2], log_loss=True)(logits2, labels2))
    ref2 = _reference_dice_loss(logits2, labels2, MULTICLASS_MODE,
                                include_classes=[1, 2], log_loss=True)
    assert jnp.allclose(got2, ref2, **TOL), (got2, ref2)

    # --- multilabel: logits (B,C,H,W), binary targets (B,C,H,W) ---
    ml_logits = jax.random.normal(ks[4], (B, C, H, W), dtype=jnp.float32)
    ml_true = (jax.random.uniform(ks[5], (B, C, H, W)) > 0.5).astype(jnp.float32)
    got3 = jax.block_until_ready(DiceLoss(MULTILABEL_MODE)(ml_logits, ml_true))
    ref3 = _reference_dice_loss(ml_logits, ml_true, MULTILABEL_MODE)
    assert jnp.allclose(got3, ref3, **TOL), (got3, ref3)

    # --- binary: logits (B,1,H,W), targets (B,H,W) ---
    b_logits = jax.random.normal(ks[6], (B, 1, H, W), dtype=jnp.float32)
    b_true = (jax.random.uniform(ks[7], (B, H, W)) > 0.5).astype(jnp.float32)
    got4 = jax.block_until_ready(DiceLoss(BINARY_MODE)(b_logits, b_true))
    ref4 = _reference_dice_loss(b_logits, b_true, BINARY_MODE)
    assert jnp.allclose(got4, ref4, **TOL), (got4, ref4)

    # --- bf16 logits fed straight through (no host-side f32 upcast) ---
    got5 = jax.block_until_ready(
        DiceLoss(MULTICLASS_MODE)(logits.astype(jnp.bfloat16), labels))
    assert jnp.allclose(got5, ref, atol=3e-2, rtol=3e-2), (got5, ref)

    print("KERNEL_OK")
</pallas_src>

<mosaic_0001>
module attributes {stable_mosaic.version = 11 : i64} {
  func.func @_multiclass_dice_sums_kernel(%arg0: i32, %arg1: i32, %arg2: memref<2x4x256xf32, #tpu.memory_space<vmem>>, %arg3: memref<2x256xi32, #tpu.memory_space<vmem>>, %arg4: memref<1x3x4xf32, #tpu.memory_space<vmem>>, %arg5: memref<4x256xi32, #tpu.memory_space<vmem>>, %arg6: memref<4x256xf32, #tpu.memory_space<vmem>>, %arg7: memref<4x256xf32, #tpu.memory_space<vmem>>, %arg8: memref<4x256xf32, #tpu.memory_space<vmem>>) attributes {dimension_semantics = [#tpu.dimension_semantics<parallel>, #tpu.dimension_semantics<arbitrary>], iteration_bounds = array<i64: 1, 1>, scalar_prefetch = 0 : i64, scratch_operands = 4 : i64, tpu.core_type = #tpu.core_type<tc>, window_params = [{transform_indices = @transform_0, window_bounds = array<i64: 2, 4, 256>}, {transform_indices = @transform_1, window_bounds = array<i64: 2, 256>}, {transform_indices = @transform_2, window_bounds = array<i64: 1, 3, 4>}]} {
    %c0_i32 = arith.constant 0 : i32
    %0 = arith.cmpi eq, %arg1, %c0_i32 : i32
    %1 = arith.extui %0 : i1 to i32
    %c0_i32_0 = arith.constant 0 : i32
    %2 = arith.cmpi ne, %1, %c0_i32_0 : i32
    scf.if %2 {
      %39 = tpu.iota {dimensions = array<i32: 0>} : vector<4x256xi32>
      %c0_25 = arith.constant 0 : index
      %c0_26 = arith.constant 0 : index
      %40 = vector.load %arg5[%c0_25, %c0_26] : memref<4x256xi32, #tpu.memory_space<vmem>>, vector<4x256xi32>
      tpu.vector_store %arg5[%c0_25, %c0_26], %39 {strides = array<i32>} : memref<4x256xi32, #tpu.memory_space<vmem>>, vector<4x256xi32>,
      %cst_27 = arith.constant 0.000000e+00 : f32
      %41 = vector.broadcast %cst_27 : f32 to vector<4x256xf32>
      %c0_28 = arith.constant 0 : index
      %c0_29 = arith.constant 0 : index
      %42 = vector.load %arg6[%c0_28, %c0_29] : memref<4x256xf32, #tpu.memory_space<vmem>>, vector<4x256xf32>
      tpu.vector_store %arg6[%c0_28, %c0_29], %41 {strides = array<i32>} : memref<4x256xf32, #tpu.memory_space<vmem>>, vector<4x256xf32>,
      %cst_30 = arith.constant 0.000000e+00 : f32
      %43 = vector.broadcast %cst_30 : f32 to vector<4x256xf32>
      %c0_31 = arith.constant 0 : index
      %c0_32 = arith.constant 0 : index
      %44 = vector.load %arg7[%c0_31, %c0_32] : memref<4x256xf32, #tpu.memory_space<vmem>>, vector<4x256xf32>
      tpu.vector_store %arg7[%c0_31, %c0_32], %43 {strides = array<i32>} : memref<4x256xf32, #tpu.memory_space<vmem>>, vector<4x256xf32>,
      %cst_33 = arith.constant 0.000000e+00 : f32
      %45 = vector.broadcast %cst_33 : f32 to vector<4x256xf32>
      %c0_34 = arith.constant 0 : index
      %c0_35 = arith.constant 0 : index
      %46 = vector.load %arg8[%c0_34, %c0_35] : memref<4x256xf32, #tpu.memory_space<vmem>>, vector<4x256xf32>
      tpu.vector_store %arg8[%c0_34, %c0_35], %45 {strides = array<i32>} : memref<4x256xf32, #tpu.memory_space<vmem>>, vector<4x256xf32>,
    } else {
    }
    %c0 = arith.constant 0 : index
    %c0_1 = arith.constant 0 : index
    %c0_2 = arith.constant 0 : index
    %3 = vector.load %arg2[%c0, %c0_1, %c0_2] : memref<2x4x256xf32, #tpu.memory_space<vmem>>, vector<2x4x256xf32>
    %c0_3 = arith.constant 0 : index
    %c0_4 = arith.constant 0 : index
    %4 = vector.load %arg3[%c0_3, %c0_4] : memref<2x256xi32, #tpu.memory_space<vmem>>, vector<2x256xi32>
    %cst = arith.constant dense<0xFF800000> : vector<2x256xf32>
    %5 = vector.multi_reduction <maximumf>, %3, %cst [1] : vector<2x4x256xf32> to vector<2x256xf32>
    %6 = vector.shape_cast %5 : vector<2x256xf32> to vector<2x1x256xf32>
    %7 = vector.broadcast %6 : vector<2x1x256xf32> to vector<2x4x256xf32>
    %8 = arith.subf %3, %7 : vector<2x4x256xf32>
    %9 = math.exp %8 : vector<2x4x256xf32>
    %cst_5 = arith.constant dense<0.000000e+00> : vector<2x256xf32>
    %10 = vector.multi_reduction <add>, %9, %cst_5 [1] : vector<2x4x256xf32> to vector<2x256xf32>
    %11 = vector.shape_cast %10 : vector<2x256xf32> to vector<2x1x256xf32>
    %12 = tpu.reciprocal %11 {approx = true} : vector<2x1x256xf32> -> vector<2x1x256xf32>
    %13 = vector.broadcast %12 : vector<2x1x256xf32> to vector<2x4x256xf32>
    %14 = arith.mulf %9, %13 : vector<2x4x256xf32>
    %c0_6 = arith.constant 0 : index
    %c0_7 = arith.constant 0 : index
    %15 = vector.load %arg5[%c0_6, %c0_7] : memref<4x256xi32, #tpu.memory_space<vmem>>, vector<4x256xi32>
    %16 = vector.shape_cast %15 : vector<4x256xi32> to vector<1x4x256xi32>
    %17 = vector.shape_cast %4 : vector<2x256xi32> to vector<2x1x256xi32>
    %18 = vector.broadcast %16 : vector<1x4x256xi32> to vector<2x4x256xi32>
    %19 = vector.broadcast %17 : vector<2x1x256xi32> to vector<2x4x256xi32>
    %20 = arith.cmpi eq, %18, %19 : vector<2x4x256xi32>
    %21 = arith.extui %20 : vector<2x4x256xi1> to vector<2x4x256xi32>
    %22 = arith.sitofp %21 : vector<2x4x256xi32> to vector<2x4x256xf32>
    %c0_8 = arith.constant 0 : index
    %c0_9 = arith.constant 0 : index
    %23 = vector.load %arg6[%c0_8, %c0_9] : memref<4x256xf32, #tpu.memory_space<vmem>>, vector<4x256xf32>
    %24 = arith.mulf %14, %22 : vector<2x4x256xf32>
    %cst_10 = arith.constant dense<0.000000e+00> : vector<4x256xf32>
    %25 = vector.multi_reduction <add>, %24, %cst_10 [0] : vector<2x4x256xf32> to vector<4x256xf32>
    %26 = arith.addf %23, %25 : vector<4x256xf32>
    %c0_11 = arith.constant 0 : index
    %c0_12 = arith.constant 0 : index
    %27 = vector.load %arg6[%c0_11, %c0_12] : memref<4x256xf32, #tpu.memory_space<vmem>>, vector<4x256xf32>
    tpu.vector_store %arg6[%c0_11, %c0_12], %26 {strides = array<i32>} : memref<4x256xf32, #tpu.memory_space<vmem>>, vector<4x256xf32>,
    %c0_13 = arith.constant 0 : index
    %c0_14 = arith.constant 0 : index
    %28 = vector.load %arg8[%c0_13, %c0_14] : memref<4x256xf32, #tpu.memory_space<vmem>>, vector<4x256xf32>
    %cst_15 = arith.constant dense<0.000000e+00> : vector<4x256xf32>
    %29 = vector.multi_reduction <add>, %22, %cst_15 [0] : vector<2x4x256xf32> to vector<4x256xf32>
    %30 = arith.addf %28, %29 : vector<4x256xf32>
    %c0_16 = arith.constant 0 : index
    %c0_17 = arith.constant 0 : index
    %31 = vector.load %arg8[%c0_16, %c0_17] : memref<4x256xf32, #tpu.memory_space<vmem>>, vector<4x256xf32>
    tpu.vector_store %arg8[%c0_16, %c0_17], %30 {strides = array<i32>} : memref<4x256xf32, #tpu.memory_space<vmem>>, vector<4x256xf32>,
    %cst_18 = arith.constant dense<0.000000e+00> : vector<4x256xf32>
    %32 = vector.multi_reduction <add>, %14, %cst_18 [0] : vector<2x4x256xf32> to vector<4x256xf32>
    %c0_19 = arith.constant 0 : index
    %c0_20 = arith.constant 0 : index
    %33 = vector.load %arg7[%c0_19, %c0_20] : memref<4x256xf32, #tpu.memory_space<vmem>>, vector<4x256xf32>
    %34 = arith.addf %33, %32 : vector<4x256xf32>
    %c0_21 = arith.constant 0 : index
    %c0_22 = arith.constant 0 : index
    %35 = vector.load %arg7[%c0_21, %c0_22] : memref<4x256xf32, #tpu.memory_space<vmem>>, vector<4x256xf32>
    tpu.vector_store %arg7[%c0_21, %c0_22], %34 {strides = array<i32>} : memref<4x256xf32, #tpu.memory_space<vmem>>, vector<4x256xf32>,
    %c0_i32_23 = arith.constant 0 : i32
    %36 = arith.cmpi eq, %arg1, %c0_i32_23 : i32
    %37 = arith.extui %36 : i1 to i32
    %c0_i32_24 = arith.constant 0 : i32
    %38 = arith.cmpi ne, %37, %c0_i32_24 : i32
    scf.if %38 {
      %c0_25 = arith.constant 0 : index
      %c0_26 = arith.constant 0 : index
      %39 = vector.load %arg6[%c0_25, %c0_26] : memref<4x256xf32, #tpu.memory_space<vmem>>, vector<4x256xf32>
      %cst_27 = arith.constant dense<0.000000e+00> : vector<4xf32>
      %40 = vector.multi_reduction <add>, %39, %cst_27 [1] : vector<4x256xf32> to vector<4xf32>
      %41 = vector.shape_cast %40 : vector<4xf32> to vector<1x1x4xf32>
      %c0_28 = arith.constant 0 : index
      %c0_29 = arith.constant 0 : index
      %c0_30 = arith.constant 0 : index
      %42 = vector.load %arg4[%c0_28, %c0_29, %c0_30] : memref<1x3x4xf32, #tpu.memory_space<vmem>>, vector<1x1x4xf32>
      tpu.vector_store %arg4[%c0_28, %c0_29, %c0_30], %41 {strides = array<i32>} : memref<1x3x4xf32, #tpu.memory_space<vmem>>, vector<1x1x4xf32>,
      %c0_31 = arith.constant 0 : index
      %c0_32 = arith.constant 0 : index
      %43 = vector.load %arg7[%c0_31, %c0_32] : memref<4x256xf32, #tpu.memory_space<vmem>>, vector<4x256xf32>
      %cst_33 = arith.constant dense<0.000000e+00> : vector<4xf32>
      %44 = vector.multi_reduction <add>, %43, %cst_33 [1] : vector<4x256xf32> to vector<4xf32>
      %45 = vector.shape_cast %44 : vector<4xf32> to vector<1x1x4xf32>
      %c0_34 = arith.constant 0 : index
      %c1 = arith.constant 1 : index
      %c0_35 = arith.constant 0 : index
      %46 = vector.load %arg4[%c0_34, %c1, %c0_35] : memref<1x3x4xf32, #tpu.memory_space<vmem>>, vector<1x1x4xf32>
      tpu.vector_store %arg4[%c0_34, %c1, %c0_35], %45 {strides = array<i32>} : memref<1x3x4xf32, #tpu.memory_space<vmem>>, vector<1x1x4xf32>,
      %c0_36 = arith.constant 0 : index
      %c0_37 = arith.constant 0 : index
      %47 = vector.load %arg8[%c0_36, %c0_37] : memref<4x256xf32, #tpu.memory_space<vmem>>, vector<4x256xf32>
      %cst_38 = arith.constant dense<0.000000e+00> : vector<4xf32>
      %48 = vector.multi_reduction <add>, %47, %cst_38 [1] : vector<4x256xf32> to vector<4xf32>
      %49 = vector.shape_cast %48 : vector<4xf32> to vector<1x1x4xf32>
      %c0_39 = arith.constant 0 : index
      %c2 = arith.constant 2 : index
      %c0_40 = arith.constant 0 : index
      %50 = vector.load %arg4[%c0_39, %c2, %c0_40] : memref<1x3x4xf32, #tpu.memory_space<vmem>>, vector<1x1x4xf32>
      tpu.vector_store %arg4[%c0_39, %c2, %c0_40], %49 {strides = array<i32>} : memref<1x3x4xf32, #tpu.memory_space<vmem>>, vector<1x1x4xf32>,
    } else {
    }
    return
  }
  func.func @transform_0(%arg0: i32, %arg1: i32) -> (i32, i32, i32) {
    %c1_i32 = arith.constant 1 : i32
    %0 = arith.muli %arg0, %c1_i32 : i32
    %1 = arith.addi %0, %arg1 : i32
    %c0_i32 = arith.constant 0 : i32
    %c0_i32_0 = arith.constant 0 : i32
    %c0_i32_1 = arith.constant 0 : i32
    return %c0_i32, %c0_i32_0, %1 : i32, i32, i32
  }
  func.func @transform_1(%arg0: i32, %arg1: i32) -> (i32, i32) {
    %c1_i32 = arith.constant 1 : i32
    %0 = arith.muli %arg0, %c1_i32 : i32
    %1 = arith.addi %0, %arg1 : i32
    %c0_i32 = arith.constant 0 : i32
    %c0_i32_0 = arith.constant 0 : i32
    return %c0_i32, %1 : i32, i32
  }
  func.func @transform_2(%arg0: i32, %arg1: i32) -> (i32, i32, i32) {
    %c0_i32 = arith.constant 0 : i32
    %c0_i32_0 = arith.constant 0 : i32
    %c0_i32_1 = arith.constant 0 : i32
    return %arg0, %c0_i32, %c0_i32_0 : i32, i32, i32
  }
}

</mosaic_0001>

<llo_original>
// kernel: tpu_custom_call.1
$region0: #{tpu_custom_call.1}
  #allocation0 [shape = 'u32[]', space=smem, size = 0x4, offset = 0x4, fixed_abs, tag = 'smem constant byte address 0x4 - core index']
  #allocation1 [shape = 'u32[72,128]{1,0:T(1,128)}', space=vmem, size = 0x9000, scoped, tag = 'internal scratch']
  #allocation2 [shape = 's32[4,256]{1,0:T(4,128)}', space=vmem, size = 0x1000, scoped, tag = 'scratch operand']
  #allocation3 [shape = 'f32[4,256]{1,0:T(4,128)}', space=vmem, size = 0x1000, scoped, tag = 'scratch operand']
  #allocation4 [shape = 'f32[4,256]{1,0:T(4,128)}', space=vmem, size = 0x1000, scoped, tag = 'scratch operand']
  #allocation5 [shape = 'f32[4,256]{1,0:T(4,128)}', space=vmem, size = 0x1000, scoped, tag = 'scratch operand']
  %s0 = inlined_call_operand.hbm [shape: f32[2,4,256], index: 0, kind: input, shape index: {}]
  %s1 = inlined_call_operand.hbm [shape: s32[2,256], index: 1, kind: input, shape index: {}]
  %s2 = inlined_call_operand.vmem [shape: f32[1,3,4], index: 2, kind: output, shape index: {}]
  %s3 = sld [smem:[#allocation0]]
  $region34: #{tpu_custom_call.1} parent=0
    _
  %s5 = ssub.s32 1, %s3
  %s6 = scalar_select 0, %s5, %s3
  $region1: #{tpu_custom_call.1} parent=0
    #allocation6 [shape = 'u8[8192]{0}', space=vmem, size = 0x2000, scoped, tag = 'input window, operand 0, single buffered']
    #allocation7 [shape = 's32[1]{0}', space=sflag, size = 0x4, scoped, tag = 'scoped memory for tpu_custom_call.1']
    #allocation8 [shape = 'u8[2048]{0}', space=vmem, size = 0x800, scoped, tag = 'input window, operand 1, single buffered']
    #allocation9 [shape = 's32[1]{0}', space=sflag, size = 0x4, scoped, tag = 'scoped memory for tpu_custom_call.1']
    %7 = vsyncpa [#allocation7], 0
    %8 = vsyncpa [#allocation9], 0
    // Predicated region
    $region2: #{tpu_custom_call.1} parent=1 // pred_check
      _
    $region3: #{tpu_custom_call.1} parent=1 // pred_check_branch
      %10 = sbr.rel (0) target = $region5
    $region4: #{tpu_custom_call.1} parent=1 // pred_region
      %s11 = sadd.s32 0, 0
      %s12 = smul.u32 2, %s11
      %14 = vsyncadd [#allocation7], 0
      %s15 = smul.addr %s12, 4
      %s16 = scalar_lea.hbm %s0, %s15
      %s17 = sshll.u32 %s16, 4
      %s18 = int_to_ptr.hbm [resolvable:$true] %s17
      %s19 = sshll.u32 [#allocation6], 4
      %s20 = int_to_ptr.vmem [resolvable:$true] %s19
      %25 = dma.hbm_to_vmem [thread:$0]  %s18, 256, %s20, [#allocation7], 128, 128, 8
    $region5: #{tpu_custom_call.1} parent=1 // pred_fallthru
      _
    // Predicated region
    $region6: #{tpu_custom_call.1} parent=1 // pred_check
      _
    $region7: #{tpu_custom_call.1} parent=1 // pred_check_branch
      %27 = sbr.rel (0) target = $region9
    $region8: #{tpu_custom_call.1} parent=1 // pred_region
      %s28 = sadd.s32 0, 0
      %s29 = smul.u32 2, %s28
      %31 = vsyncadd [#allocation9], 0
      %s32 = smul.addr %s29, 2
      %s33 = scalar_lea.hbm %s1, %s32
      %s35 = sshll.u32 %s33, 4
      %s36 = int_to_ptr.hbm [resolvable:$true] %s35
      %s37 = sshll.u32 [#allocation8], 4
      %s38 = int_to_ptr.vmem [resolvable:$true] %s37
      %40 = dma.hbm_to_vmem [thread:$0]  %s36, 64, %s38, [#allocation9]
    $region9: #{tpu_custom_call.1} parent=1 // pred_fallthru
      _
    // Predicated region
    $region10: #{tpu_custom_call.1} parent=1 // pred_check
      _
    $region11: #{tpu_custom_call.1} parent=1 // pred_check_branch
      %42 = sbr.rel (0) target = $region13
    $region12: #{tpu_custom_call.1} parent=1 // pred_region
      %44 = dma.done [#allocation7], 256
    $region13: #{tpu_custom_call.1} parent=1 // pred_fallthru
      _
    // Predicated region
    $region14: #{tpu_custom_call.1} parent=1 // pred_check
      _
    $region15: #{tpu_custom_call.1} parent=1 // pred_check_branch
      %46 = sbr.rel (0) target = $region17
    $region16: #{tpu_custom_call.1} parent=1 // pred_region
      %48 = dma.done [#allocation9], 64
    $region17: #{tpu_custom_call.1} parent=1 // pred_fallthru
      _
    %s49 = sadd.s32 0, 0
    %s50 = smul.u32 2, %s49
    %s51 = sadd.s32 0, 0
    %s52 = smul.u32 2, %s51
    %p53 = scmp.eq.s32.totalorder 0, 0
    // Predicated region
    $region18: #{tpu_custom_call.1} parent=1 // pred_check
      %p54 = pneg %p53
    $region19: #{tpu_custom_call.1} parent=1 // pred_check_branch
      %56 = sbr.rel (%p54) target = $region21
    $region20: #{tpu_custom_call.1} parent=1 // pred_region
      %v57 = vlaneseq
      %v58 = vshrl.u32 %v57, 7
      %v60 = vunpack.c.l.s4 839922192
      %v61 = vunpack.c.0.s8 %v60
      %v62 = vperm.slane %v58, %v61
      %63 = vst [vmem:[#allocation2] sm:$0xff] %v62
      %64 = vst [vmem:[#allocation3] sm:$0xff] 0.0
      %65 = vst [vmem:[#allocation4] sm:$0xff] 0.0
      %66 = vst [vmem:[#allocation5] sm:$0xff] 0.0
    $region21: #{tpu_custom_call.1} parent=1 // pred_fallthru
      _
    %v67 = vld [vmem:[#allocation6] sm:$0xff]
    %v68 = vld [vmem:[#allocation6 + $0x8] sm:$0xff]
    %v69 = vld [vmem:[#allocation8] sm:$0xf]
    %72 = vst [vmem:[#allocation1] ss:$2 sm:$0xff] %v67
    %v73 = vld.sshfl [vmem:[#allocation1] sm:$0xff pattern:$0x75316420]
    %v74 = vld.sshfl [vmem:[#allocation1 + $0x8] sm:$0xff pattern:$0x75316420]
    %s75 = scalar_lea.vmem [#allocation1], 16
    %76 = vst [vmem:[%s75] ss:$2 sm:$0xff] %v68
    %v77 = vld.sshfl [vmem:[#allocation1 + $0x10] sm:$0xff pattern:$0x75316420]
    %v78 = vld.sshfl [vmem:[#allocation1 + $0x18] sm:$0xff pattern:$0x75316420]
    %vm83 = vcmask 1043456
    %v84 = vsel %vm83, %v73, -inf
    %v85 = vrot.slane %v84, 4
    %v86 = vmax.f32 %v84, %v85
    %v87 = vrot.slane %v86, 2
    %v88 = vmax.f32 %v86, %v87
    %v89 = vrot.slane %v88, 1
    %v90 = vmax.f32 %v88, %v89
    %v91 = vsel %vm83, %v74, -inf
    %v92 = vrot.slane %v91, 4
    %v93 = vmax.f32 %v91, %v92
    %v94 = vrot.slane %v93, 2
    %v95 = vmax.f32 %v93, %v94
    %v96 = vrot.slane %v95, 1
    %v97 = vmax.f32 %v95, %v96
    %v98 = vsel %vm83, %v77, -inf
    %v99 = vrot.slane %v98, 4
    %v100 = vmax.f32 %v98, %v99
    %v101 = vrot.slane %v100, 2
    %v102 = vmax.f32 %v100, %v101
    %v103 = vrot.slane %v102, 1
    %v104 = vmax.f32 %v102, %v103
    %v105 = vsel %vm83, %v78, -inf
    %v106 = vrot.slane %v105, 4
    %v107 = vmax.f32 %v105, %v106
    %v108 = vrot.slane %v107, 2
    %v109 = vmax.f32 %v107, %v108
    %v110 = vrot.slane %v109, 1
    %v111 = vmax.f32 %v109, %v110
    %v116 = vrot.slane %v97, 4
    %v117 = vrot.slane %v111, 4
    %v118 = vsel %vm83, %v90, %v116
    %v119 = vsel %vm83, %v104, %v117
    %v122 = vsub.f32 %v67, %v118
    %v123 = vsub.f32 %v68, %v119
    %v124 = vmul.f32 %v122, 1.442695
    %v125 = vpow.pop %v124
    %v126 = vmul.f32 %v123, 1.442695
    %v127 = vpow.pop %v126
    %130 = vst [vmem:[#allocation1] ss:$2 sm:$0xff] %v125
    %v131 = vld.sshfl [vmem:[#allocation1] sm:$0xff pattern:$0x75316420]
    %v132 = vld.sshfl [vmem:[#allocation1 + $0x8] sm:$0xff pattern:$0x75316420]
    %s133 = scalar_lea.vmem [#allocation1], 16
    %134 = vst [vmem:[%s133] ss:$2 sm:$0xff] %v127
    %v135 = vld.sshfl [vmem:[#allocation1 + $0x10] sm:$0xff pattern:$0x75316420]
    %v136 = vld.sshfl [vmem:[#allocation1 + $0x18] sm:$0xff pattern:$0x75316420]
    %v141 = vsel %vm83, %v131, 0.0
    %v142 = vrot.slane %v141, 4
    %v143 = vadd.f32 %v141, %v142
    %v144 = vrot.slane %v143, 2
    %v145 = vadd.f32 %v143, %v144
    %v146 = vrot.slane %v145, 1
    %v147 = vadd.f32 %v145, %v146
    %v148 = vsel %vm83, %v132, 0.0
    %v149 = vrot.slane %v148, 4
    %v150 = vadd.f32 %v148, %v149
    %v151 = vrot.slane %v150, 2
    %v152 = vadd.f32 %v150, %v151
    %v153 = vrot.slane %v152, 1
    %v154 = vadd.f32 %v152, %v153
    %v155 = vsel %vm83, %v135, 0.0
    %v156 = vrot.slane %v155, 4
    %v157 = vadd.f32 %v155, %v156
    %v158 = vrot.slane %v157, 2
    %v159 = vadd.f32 %v157, %v158
    %v160 = vrot.slane %v159, 1
    %v161 = vadd.f32 %v159, %v160
    %v162 = vsel %vm83, %v136, 0.0
    %v163 = vrot.slane %v162, 4
    %v164 = vadd.f32 %v162, %v163
    %v165 = vrot.slane %v164, 2
    %v166 = vadd.f32 %v164, %v165
    %v167 = vrot.slane %v166, 1
    %v168 = vadd.f32 %v166, %v167
    %v169 = vrcp.pop %v147
    %v170 = vrcp.pop %v154
    %v171 = vrcp.pop %v161
    %v172 = vrcp.pop %v168
    %v177 = vrot.slane %v170, 4
    %v178 = vrot.slane %v172, 4
    %v179 = vsel %vm83, %v169, %v177
    %v180 = vsel %vm83, %v171, %v178
    %v183 = vmul.f32 %v125, %v179
    %v184 = vmul.f32 %v127, %v180
    %v185 = vld [vmem:[#allocation2] sm:$0xff]
    %v186 = vrot.slane %v69, 1
    %v187 = vrot.slane %v69, 2
    %v188 = vrot.slane %v69, 3
    %vm189 = vcmask 1040384
    %v190 = vsel %vm189, %v69, %v186
    %vm191 = vcmask 1042434
    %v192 = vsel %vm191, %v187, %v188
    %vm193 = vcmask 1041408
    %v194 = vsel %vm193, %v190, %v192
    %vm195 = vcmask 1041409
    %v196 = vsel %vm195, %v69, %v186
    %vm197 = vcmask 1043459
    %v198 = vsel %vm197, %v187, %v188
    %vm199 = vcmask 1042433
    %v200 = vsel %vm199, %v196, %v198
    %v201 = vrot.slane %v200, 1
    %v202 = vperm.slane %v194, 0
    %v203 = vperm.slane %v194, 1
    %v204 = vperm.slane %v201, 0
    %v205 = vperm.slane %v201, 1
    %v206 = vrot.slane %v203, 4
    %v207 = vrot.slane %v205, 4
    %v208 = vsel %vm83, %v202, %v206
    %v209 = vsel %vm83, %v204, %v207
    %vm210 = vcmp.eq.s32.totalorder %v185, %v208
    %vm211 = vcmp.eq.s32.totalorder %v185, %v209
    %v212 = vsel %vm210, 1, 0
    %v213 = vsel %vm211, 1, 0
    %v214 = vcvt.s32.f32 %v212
    %v215 = vcvt.s32.f32 %v213
    %v216 = vld [vmem:[#allocation3] sm:$0xff]
    %v217 = vmul.f32 %v183, %v214
    %v218 = vmul.f32 %v184, %v215
    %221 = vst [vmem:[#allocation1] ss:$2 sm:$0xff] %v217
    %v222 = vld.sshfl [vmem:[#allocation1] sm:$0xff pattern:$0x75316420]
    %v223 = vld.sshfl [vmem:[#allocation1 + $0x8] sm:$0xff pattern:$0x75316420]
    %s224 = scalar_lea.vmem [#allocation1], 16
    %225 = vst [vmem:[%s224] ss:$2 sm:$0xff] %v218
    %v226 = vld.sshfl [vmem:[#allocation1 + $0x10] sm:$0xff pattern:$0x75316420]
    %v227 = vld.sshfl [vmem:[#allocation1 + $0x18] sm:$0xff pattern:$0x75316420]
    %v232 = vsel %vm83, %v222, 0.0
    %v233 = vsel %vm83, %v226, 0.0
    %v234 = vadd.f32 %v232, %v233
    %v235 = vsel %vm83, %v223, 0.0
    %v236 = vsel %vm83, %v227, 0.0
    %v237 = vadd.f32 %v235, %v236
    %v240 = vrot.slane %v237, 4
    %v241 = vsel %vm83, %v234, %v240
    %v243 = vadd.f32 %v216, %v241
    %244 = vst [vmem:[#allocation3] sm:$0xff] %v243
    %v245 = vld [vmem:[#allocation5] sm:$0xff]
    %248 = vst [vmem:[#allocation1] ss:$2 sm:$0xff] %v214
    %v249 = vld.sshfl [vmem:[#allocation1] sm:$0xff pattern:$0x75316420]
    %v250 = vld.sshfl [vmem:[#allocation1 + $0x8] sm:$0xff pattern:$0x75316420]
    %s251 = scalar_lea.vmem [#allocation1], 16
    %252 = vst [vmem:[%s251] ss:$2 sm:$0xff] %v215
    %v253 = vld.sshfl [vmem:[#allocation1 + $0x10] sm:$0xff pattern:$0x75316420]
    %v254 = vld.sshfl [vmem:[#allocation1 + $0x18] sm:$0xff pattern:$0x75316420]
    %v259 = vsel %vm83, %v249, 0.0
    %v260 = vsel %vm83, %v253, 0.0
    %v261 = vadd.f32 %v259, %v260
    %v262 = vsel %vm83, %v250, 0.0
    %v263 = vsel %vm83, %v254, 0.0
    %v264 = vadd.f32 %v262, %v263
    %v267 = vrot.slane %v264, 4
    %v268 = vsel %vm83, %v261, %v267
    %v270 = vadd.f32 %v245, %v268
    %271 = vst [vmem:[#allocation5] sm:$0xff] %v270
    %274 = vst [vmem:[#allocation1] ss:$2 sm:$0xff] %v183
    %v275 = vld.sshfl [vmem:[#allocation1] sm:$0xff pattern:$0x75316420]
    %v276 = vld.sshfl [vmem:[#allocation1 + $0x8] sm:$0xff pattern:$0x75316420]
    %s277 = scalar_lea.vmem [#allocation1], 16
    %278 = vst [vmem:[%s277] ss:$2 sm:$0xff] %v184
    %v279 = vld.sshfl [vmem:[#allocation1 + $0x10] sm:$0xff pattern:$0x75316420]
    %v280 = vld.sshfl [vmem:[#allocation1 + $0x18] sm:$0xff pattern:$0x75316420]
    %v285 = vsel %vm83, %v275, 0.0
    %v286 = vsel %vm83, %v279, 0.0
    %v287 = vadd.f32 %v285, %v286
    %v288 = vsel %vm83, %v276, 0.0
    %v289 = vsel %vm83, %v280, 0.0
    %v290 = vadd.f32 %v288, %v289
    %v291 = vld [vmem:[#allocation4] sm:$0xff]
    %v294 = vrot.slane %v290, 4
    %v295 = vsel %vm83, %v287, %v294
    %v297 = vadd.f32 %v291, %v295
    %298 = vst [vmem:[#allocation4] sm:$0xff] %v297
    // Predicated region
    $region22: #{tpu_custom_call.1} parent=1 // pred_check
      %p299 = pneg %p53
    $region23: #{tpu_custom_call.1} parent=1 // pred_check_branch
      %301 = sbr.rel (%p299) target = $region25
    $region24: #{tpu_custom_call.1} parent=1 // pred_region
      %v302 = vld [vmem:[#allocation3] sm:$0xff]
      %304 = vst [vmem:[#allocation1] ss:$2 sm:$0xff] %v302
      %v305 = vld.sshfl [vmem:[#allocation1] sm:$0xff pattern:$0x75316420]
      %v306 = vld.sshfl [vmem:[#allocation1 + $0x8] sm:$0xff pattern:$0x75316420]
      %v309 = vsel %vm83, %v305, 0.0
      %v310 = vsel %vm83, %v306, 0.0
      %v311 = vadd.f32 %v309, %v310
      %312 = vadd.xlane.f32.xlu0 %v311
      %v313 = vpop.xlane.xlu0 %312
      %v315 = vlaneseq
      %v316 = vand.u32 %v315, 127
      %v317 = vperm.slane %v313, %v316
      %vm319 = vcmask 24576
      %320 = vst.msk [vmem:[%s2] sm:$0x1] %vm319, %v317
      %v321 = vld [vmem:[#allocation4] sm:$0xff]
      %323 = vst [vmem:[#allocation1] ss:$2 sm:$0xff] %v321
      %v324 = vld.sshfl [vmem:[#allocation1] sm:$0xff pattern:$0x75316420]
      %v325 = vld.sshfl [vmem:[#allocation1 + $0x8] sm:$0xff pattern:$0x75316420]
      %v328 = vsel %vm83, %v324, 0.0
      %v329 = vsel %vm83, %v325, 0.0
      %v330 = vadd.f32 %v328, %v329
      %331 = vadd.xlane.f32.xlu0 %v330
      %v332 = vpop.xlane.xlu0 %331
      %v334 = vperm.slane %v332, %v316
      %336 = vst.msk [vmem:[%s2 + $0x1] sm:$0x1] %vm319, %v334
      %v337 = vld [vmem:[#allocation5] sm:$0xff]
      %339 = vst [vmem:[#allocation1] ss:$2 sm:$0xff] %v337
      %v340 = vld.sshfl [vmem:[#allocation1] sm:$0xff pattern:$0x75316420]
      %v341 = vld.sshfl [vmem:[#allocation1 + $0x8] sm:$0xff pattern:$0x75316420]
      %v344 = vsel %vm83, %v340, 0.0
      %v345 = vsel %vm83, %v341, 0.0
      %v346 = vadd.f32 %v344, %v345
      %347 = vadd.xlane.f32.xlu0 %v346
      %v348 = vpop.xlane.xlu0 %347
      %v350 = vperm.slane %v348, %v316
      %352 = vst.msk [vmem:[%s2 + $0x2] sm:$0x1] %vm319, %v350
    $region25: #{tpu_custom_call.1} parent=1 // pred_fallthru
      _
    // Predicated region
    $region26: #{tpu_custom_call.1} parent=1 // pred_check
      _
    $region27: #{tpu_custom_call.1} parent=1 // pred_check_branch
      %354 = sbr.rel (0) target = $region29
    $region28: #{tpu_custom_call.1} parent=1 // pred_region
      _
    $region29: #{tpu_custom_call.1} parent=1 // pred_fallthru
      _
    // Predicated region
    $region30: #{tpu_custom_call.1} parent=1 // pred_check
      _
    $region31: #{tpu_custom_call.1} parent=1 // pred_check_branch
      %356 = sbr.rel (0) target = $region33
    $region32: #{tpu_custom_call.1} parent=1 // pred_region
      _
    $region33: #{tpu_custom_call.1} parent=1 // pred_fallthru
      _
    %357 = vsyncpa [#allocation7], 1
    %358 = vsyncpa [#allocation9], 1

</llo_original>
